<compile_context>
chip_gen: v6e
topology: v6e:2x2x1
jax: 0.10.0
libtpu: 0.0.40
codegen_flags: <defaults>
</compile_context>

<pallas_src>
import functools

import jax
import jax.numpy as jnp
from jax.experimental import pallas as pl
from jax.experimental.pallas import tpu as pltpu

_LANE = 128


def _round_up(x: int, m: int) -> int:
    return (x + m - 1) // m * m


def _pick_tile(dim: int, max_tile: int, align: int, waste_frac: float = 0.0) -> int:
    """Largest multiple-of-`align` tile <= max_tile such that round_up(dim, tile)
    exceeds round_up(dim, align) by at most `waste_frac`.
    waste_frac == 0.0  =>  the tile exactly divides round_up(dim, align)."""
    pmin = _round_up(dim, align)
    max_tile = max(align, (max_tile // align) * align)
    if pmin <= max_tile:
        return pmin
    budget = pmin + int(pmin * waste_frac)
    for t in range(max_tile, align - 1, -align):
        if _round_up(dim, t) <= budget:
            return t
    return align


@functools.lru_cache(maxsize=1)
def _scoped_vmem_budget() -> int:
    """Generation-aware scoped-VMEM request: 3/4 of physical, capped at 96 MiB.
    (v5e/v6e: 128 MiB phys -> 96 MiB; v7x: 64 MiB phys -> 48 MiB.)"""
    cap = 64 * 1024 * 1024  # conservative fallback
    try:
        cap = int(pltpu.get_tpu_info().vmem_capacity_bytes)
    except Exception:
        pass
    return int(min(96 * 1024 * 1024, (cap * 3) // 4))


# ----------------------------- kernel bodies ------------------------------ #

def _linear_kernel_acc(x_ref, w_ref, b_ref, o_ref, acc_ref):
    """One (tm, tn) output tile; grid axis 2 is the K reduction. Used when the
    output dtype is narrower than f32 (f32 scratch accumulator, single cast)."""
    k = pl.program_id(2)

    @pl.when(k == 0)
    def _init():
        acc_ref[...] = jnp.zeros_like(acc_ref)

    acc_ref[...] += jnp.dot(x_ref[...], w_ref[...],
                            preferred_element_type=jnp.float32)

    @pl.when(k == pl.num_programs(2) - 1)
    def _finalize():
        o_ref[...] = (acc_ref[...] + b_ref[...]).astype(o_ref.dtype)


def _linear_kernel_f32out(x_ref, w_ref, b_ref, o_ref):
    """f32 output: accumulate directly into the output tile (it is resident
    across the K axis because its index_map ignores k) — no scratch, no final
    acc->o copy."""
    k = pl.program_id(2)

    @pl.when(k == 0)
    def _init():
        o_ref[...] = jnp.zeros_like(o_ref)

    o_ref[...] += jnp.dot(x_ref[...], w_ref[...],
                          preferred_element_type=jnp.float32)

    @pl.when(k == pl.num_programs(2) - 1)
    def _bias():
        o_ref[...] += b_ref[...]


# ------------------------------ host wrapper ------------------------------ #

def pallas_linear(x, w_p, b_p, d_out, *, tm=512, tn=512, tk=None, out_dtype=None):
    """y = (x @ w_p + b_p)[:, :d_out].

    x:    (B, d_in)                          — compute dtype (f32 or bf16)
    w_p:  (round_up(d_in,128), round_up(d_out,128)) — pre-padded, compute dtype
    b_p:  (1, round_up(d_out,128))           — pre-padded, f32
    """
    B, d_in = x.shape
    kp, np_ = w_p.shape                      # already multiples of 128
    out_dtype = out_dtype or x.dtype
    in_bytes = jnp.dtype(x.dtype).itemsize
    out_bytes = jnp.dtype(out_dtype).itemsize

    if tk is None:
        tk = 2048 if in_bytes <= 2 else 1024

    align_m = 16 if in_bytes <= 2 else 8     # bf16 packs two rows per sublane

    tm_eff = _pick_tile(B, tm, align_m, waste_frac=0.125)
    tn_eff = _pick_tile(np_, tn, _LANE)      # exactly divides np_
    tk_eff = _pick_tile(kp, tk, _LANE)       # exactly divides kp

    # Fit double-buffered tiles (+ accumulator, worst case) under the budget.
    budget = _scoped_vmem_budget() - (2 << 20)

    def footprint(tm_, tn_, tk_):
        return (2 * (tm_ * tk_ + tk_ * tn_) * in_bytes   # x, w (double-buffered)
                + 2 * tm_ * tn_ * out_bytes               # output
                + tm_ * tn_ * 4                           # f32 accumulator
                + 2 * tn_ * 4)                            # bias

    while footprint(tm_eff, tn_eff, tk_eff) > budget and tk_eff > _LANE:
        tk_eff = _pick_tile(kp, tk_eff // 2, _LANE)
    while footprint(tm_eff, tn_eff, tk_eff) > budget and tn_eff > _LANE:
        tn_eff = _pick_tile(np_, tn_eff // 2, _LANE)

    mp = _round_up(B, tm_eff)

    # v7x megacore: guarantee >= 2 "parallel" grid points when possible.
    if (mp // tm_eff) * (np_ // tn_eff) == 1:
        if np_ >= 2 * _LANE:
            tn_eff = _pick_tile(np_, tn_eff // 2, _LANE)
        elif mp >= 2 * align_m:
            tm_eff = _pick_tile(B, tm_eff // 2, align_m, waste_frac=0.125)
            mp = _round_up(B, tm_eff)

    # Only x is padded per call (weight/bias were padded once at init).
    xp = x
    if mp != B or kp != d_in:
        xp = jnp.pad(x, ((0, mp - B), (0, kp - d_in)))

    grid = (mp // tm_eff, np_ // tn_eff, kp // tk_eff)

    use_inplace = jnp.dtype(out_dtype) == jnp.float32
    kernel = _linear_kernel_f32out if use_inplace else _linear_kernel_acc
    scratch = [] if use_inplace else [pltpu.VMEM((tm_eff, tn_eff), jnp.float32)]

    yp = pl.pallas_call(
        kernel,
        out_shape=jax.ShapeDtypeStruct((mp, np_), out_dtype),
        grid_spec=pl.GridSpec(
            grid=grid,
            in_specs=[
                pl.BlockSpec((tm_eff, tk_eff), lambda i, j, k: (i, k)),
                pl.BlockSpec((tk_eff, tn_eff), lambda i, j, k: (k, j)),
                pl.BlockSpec((1, tn_eff), lambda i, j, k: (0, j)),
            ],
            out_specs=pl.BlockSpec((tm_eff, tn_eff), lambda i, j, k: (i, j)),
            scratch_shapes=scratch,
        ),
        compiler_params=pltpu.CompilerParams(
            dimension_semantics=("parallel", "parallel", "arbitrary"),
            vmem_limit_bytes=int(_scoped_vmem_budget()),
        ),
    )(xp, w_p, b_p)

    if mp != B or np_ != d_out:
        yp = yp[:B, :d_out]
    return yp


class PallasLinear:
    """torch.nn.Linear equivalent: y = x @ weight.T + bias.

    Weight is transposed, cast to the MXU compute dtype (bf16 by default for
    v5e/v6e/v7x MXU peak) and lane-padded ONCE here; bias is reshaped / padded
    once too.  Accumulation is always f32 inside the kernel."""

    def __init__(self, weight, bias, *, compute_dtype=jnp.bfloat16):
        w_t = jnp.asarray(weight, dtype=jnp.float32).T          # (d_in, d_out)
        self.d_in, self.d_out = int(w_t.shape[0]), int(w_t.shape[1])
        kp = _round_up(self.d_in, _LANE)
        np_ = _round_up(self.d_out, _LANE)
        if (kp, np_) != (self.d_in, self.d_out):
            w_t = jnp.pad(w_t, ((0, kp - self.d_in), (0, np_ - self.d_out)))
        self.w_p = w_t.astype(compute_dtype)
        b = jnp.asarray(bias, dtype=jnp.float32).reshape(1, -1)
        if np_ != self.d_out:
            b = jnp.pad(b, ((0, 0), (0, np_ - self.d_out)))
        self.b_p = b
        self.compute_dtype = compute_dtype

    def __call__(self, x):
        out_dtype = x.dtype
        B, d_in = x.shape
        assert d_in == self.d_in, (d_in, self.d_in)
        xc = x.astype(self.compute_dtype)
        # Small-problem fast path: when K/N are below one lane tile or the
        # whole problem is trivially small, lane-padding + pallas_call overhead
        # dominates — XLA's fused dot is strictly faster.
        if min(self.d_in, self.d_out) < _LANE or B * self.d_in * self.d_out < 8 * 128 * 128:
            y = jnp.dot(xc, self.w_p[: self.d_in, : self.d_out],
                        preferred_element_type=jnp.float32)
            return (y + self.b_p[:, : self.d_out]).astype(out_dtype)
        return pallas_linear(xc, self.w_p, self.b_p, self.d_out, out_dtype=out_dtype)


class TupleWrapper:
    """JAX/Pallas equivalent of the PyTorch TupleWrapper: applies the wrapped
    layer to the first tuple element, passes the second through unchanged."""

    def __init__(self, layer):
        self.layer = layer

    def __call__(self, X):
        x, x_cond = X
        return (self.layer(x), x_cond)


if __name__ == "__main__":
    key = jax.random.PRNGKey(0)
    k_x, k_c, k_w, k_b = jax.random.split(key, 4)

    # Small but lane-dense shapes so the Pallas path (not the XLA fast path)
    # is exercised: B=16 (bf16 sublane-aligned), d_in=d_out=256.
    batch, d_in, d_out = 16, 256, 256
    cond_dim = 32

    x = jax.random.normal(k_x, (batch, d_in), dtype=jnp.float32)
    x_cond = jax.random.normal(k_c, (batch, cond_dim), dtype=jnp.float32)
    weight = jax.random.normal(k_w, (d_out, d_in), dtype=jnp.float32) * 0.05
    bias = jax.random.normal(k_b, (d_out,), dtype=jnp.float32) * 0.05

    # Default path: bf16 MXU operands, f32 accumulation + f32 bias epilogue.
    wrapper = TupleWrapper(PallasLinear(weight, bias))
    y, y_cond = wrapper((x, x_cond))
    jax.block_until_ready(y)
    jax.block_until_ready(y_cond)

    assert y.shape == (batch, d_out) and y.dtype == x.dtype
    assert y_cond.shape == (batch, cond_dim)
    assert jnp.array_equal(y_cond, x_cond)

    # Tight check against a bf16-operand reference, loose check against f32
    # (operand-rounding error only; accumulation stays f32).
    ref_bf16 = jnp.dot(x.astype(jnp.bfloat16), weight.T.astype(jnp.bfloat16),
                       preferred_element_type=jnp.float32) + bias
    ref_f32 = x @ weight.T + bias
    assert jnp.allclose(y, ref_bf16, atol=1e-3, rtol=1e-3)
    assert jnp.allclose(y, ref_f32, atol=3e-2, rtol=3e-2)

    # Exact-precision config (f32 operands) still matches the f32 reference.
    y32, _ = TupleWrapper(PallasLinear(weight, bias, compute_dtype=jnp.float32))((x, x_cond))
    jax.block_until_ready(y32)
    assert jnp.allclose(y32, ref_f32, atol=1e-4, rtol=1e-4)

    print("KERNEL_OK")
</pallas_src>

<mosaic_0001>
module attributes {stable_mosaic.version = 11 : i64} {
  func.func @_linear_kernel_f32out(%arg0: i32, %arg1: i32, %arg2: i32, %arg3: memref<16x256xbf16, #tpu.memory_space<vmem>>, %arg4: memref<256x128xbf16, #tpu.memory_space<vmem>>, %arg5: memref<1x128xf32, #tpu.memory_space<vmem>>, %arg6: memref<16x128xf32, #tpu.memory_space<vmem>>) attributes {dimension_semantics = [#tpu.dimension_semantics<parallel>, #tpu.dimension_semantics<parallel>, #tpu.dimension_semantics<arbitrary>], iteration_bounds = array<i64: 1, 2, 1>, scalar_prefetch = 0 : i64, scratch_operands = 0 : i64, tpu.core_type = #tpu.core_type<tc>, window_params = [{transform_indices = @transform_0, window_bounds = array<i64: 16, 256>}, {transform_indices = @transform_1, window_bounds = array<i64: 256, 128>}, {transform_indices = @transform_2, window_bounds = array<i64: 1, 128>}, {transform_indices = @transform_3, window_bounds = array<i64: 16, 128>}]} {
    %c0_i32 = arith.constant 0 : i32
    %0 = arith.cmpi eq, %arg2, %c0_i32 : i32
    %1 = arith.extui %0 : i1 to i32
    %c0_i32_0 = arith.constant 0 : i32
    %2 = arith.cmpi ne, %1, %c0_i32_0 : i32
    scf.if %2 {
      %cst_10 = arith.constant 0.000000e+00 : f32
      %12 = vector.broadcast %cst_10 : f32 to vector<16x128xf32>
      %c0_11 = arith.constant 0 : index
      %c0_12 = arith.constant 0 : index
      %13 = vector.load %arg6[%c0_11, %c0_12] : memref<16x128xf32, #tpu.memory_space<vmem>>, vector<16x128xf32>
      tpu.vector_store %arg6[%c0_11, %c0_12], %12 {strides = array<i32>} : memref<16x128xf32, #tpu.memory_space<vmem>>, vector<16x128xf32>,
    } else {
    }
    %c0 = arith.constant 0 : index
    %c0_1 = arith.constant 0 : index
    %3 = vector.load %arg6[%c0, %c0_1] : memref<16x128xf32, #tpu.memory_space<vmem>>, vector<16x128xf32>
    %c0_2 = arith.constant 0 : index
    %c0_3 = arith.constant 0 : index
    %4 = vector.load %arg3[%c0_2, %c0_3] : memref<16x256xbf16, #tpu.memory_space<vmem>>, vector<16x256xbf16>
    %c0_4 = arith.constant 0 : index
    %c0_5 = arith.constant 0 : index
    %5 = vector.load %arg4[%c0_4, %c0_5] : memref<256x128xbf16, #tpu.memory_space<vmem>>, vector<256x128xbf16>
    %cst = arith.constant dense<0.000000e+00> : vector<16x128xf32>
    %6 = tpu.matmul %4, %5, %cst {dimension_numbers = #tpu.dot_dimension_numbers<[1], [0], [0], [1], [0, 0, 1, 1], [], []>} : vector<16x256xbf16>, vector<256x128xbf16>, vector<16x128xf32> -> vector<16x128xf32>
    %7 = arith.addf %3, %6 : vector<16x128xf32>
    %c0_6 = arith.constant 0 : index
    %c0_7 = arith.constant 0 : index
    %8 = vector.load %arg6[%c0_6, %c0_7] : memref<16x128xf32, #tpu.memory_space<vmem>>, vector<16x128xf32>
    tpu.vector_store %arg6[%c0_6, %c0_7], %7 {strides = array<i32>} : memref<16x128xf32, #tpu.memory_space<vmem>>, vector<16x128xf32>,
    %c0_i32_8 = arith.constant 0 : i32
    %9 = arith.cmpi eq, %arg2, %c0_i32_8 : i32
    %10 = arith.extui %9 : i1 to i32
    %c0_i32_9 = arith.constant 0 : i32
    %11 = arith.cmpi ne, %10, %c0_i32_9 : i32
    scf.if %11 {
      %c0_10 = arith.constant 0 : index
      %c0_11 = arith.constant 0 : index
      %12 = vector.load %arg6[%c0_10, %c0_11] : memref<16x128xf32, #tpu.memory_space<vmem>>, vector<16x128xf32>
      %c0_12 = arith.constant 0 : index
      %c0_13 = arith.constant 0 : index
      %13 = vector.load %arg5[%c0_12, %c0_13] : memref<1x128xf32, #tpu.memory_space<vmem>>, vector<1x128xf32>
      %14 = vector.broadcast %13 : vector<1x128xf32> to vector<16x128xf32>
      %15 = arith.addf %12, %14 : vector<16x128xf32>
      %c0_14 = arith.constant 0 : index
      %c0_15 = arith.constant 0 : index
      %16 = vector.load %arg6[%c0_14, %c0_15] : memref<16x128xf32, #tpu.memory_space<vmem>>, vector<16x128xf32>
      tpu.vector_store %arg6[%c0_14, %c0_15], %15 {strides = array<i32>} : memref<16x128xf32, #tpu.memory_space<vmem>>, vector<16x128xf32>,
    } else {
    }
    return
  }
  func.func @transform_0(%arg0: i32, %arg1: i32, %arg2: i32) -> (i32, i32) {
    %c0_i32 = arith.constant 0 : i32
    return %arg0, %arg2 : i32, i32
  }
  func.func @transform_1(%arg0: i32, %arg1: i32, %arg2: i32) -> (i32, i32) {
    %c0_i32 = arith.constant 0 : i32
    return %arg2, %arg1 : i32, i32
  }
  func.func @transform_2(%arg0: i32, %arg1: i32, %arg2: i32) -> (i32, i32) {
    %c0_i32 = arith.constant 0 : i32
    %c0_i32_0 = arith.constant 0 : i32
    return %c0_i32, %arg1 : i32, i32
  }
  func.func @transform_3(%arg0: i32, %arg1: i32, %arg2: i32) -> (i32, i32) {
    %c0_i32 = arith.constant 0 : i32
    return %arg0, %arg1 : i32, i32
  }
}

</mosaic_0001>

<llo_original>
// kernel: tpu_custom_call.1
$region0: #{tpu_custom_call.1}
  #allocation0 [shape = 'u32[]', space=smem, size = 0x4, offset = 0x4, fixed_abs, tag = 'smem constant byte address 0x4 - core index']
  #allocation1 [shape = 'u32[144,128]{1,0:T(1,128)}', space=vmem, size = 0x12000, scoped, tag = 'internal scratch']
  %s0 = inlined_call_operand.hbm [shape: bf16[16,256], index: 0, kind: input, shape index: {}]
  %s1 = inlined_call_operand.hbm [shape: bf16[256,256], index: 1, kind: input, shape index: {}]
  %s2 = inlined_call_operand.vmem [shape: f32[1,256], index: 2, kind: input, shape index: {}]
  %s3 = inlined_call_operand.hbm [shape: f32[16,256], index: 3, kind: output, shape index: {}]
  %s4 = sld [smem:[#allocation0]]
  $region61: #{tpu_custom_call.1} parent=0
    _
  %s6 = ssub.s32 1, %s4
  %s7 = scalar_select 0, %s6, %s4
  $region1: #{tpu_custom_call.1} parent=0
    #allocation2 [shape = 'u8[8192]{0}', space=vmem, size = 0x2000, scoped, tag = 'input window, operand 0, single buffered']
    #allocation3 [shape = 's32[2]{0}', space=sflag, size = 0x8, scoped, tag = 'scoped memory for tpu_custom_call.1']
    #allocation4 [shape = 's32[2]{0}', space=sflag, size = 0x8, scoped, tag = 'scoped memory for tpu_custom_call.1']
    #allocation5 [shape = 'u8[131072]{0}', space=vmem, size = 0x20000, scoped, tag = 'input window, operand 1']
    #allocation6 [shape = 's32[2]{0}', space=sflag, size = 0x8, scoped, tag = 'scoped memory for tpu_custom_call.1']
    #allocation7 [shape = 'u8[16384]{0}', space=vmem, size = 0x4000, scoped, tag = 'output window, operand 0']
    %8 = vsyncpa [#allocation3], 0
    %9 = vsyncpa [#allocation6], 0
    %s10 = scalar_lea.sflag [#allocation6], 1
    %11 = vsyncpa %s10, 0
    %12 = vsyncpa [#allocation4], 0
    %s13 = scalar_lea.sflag [#allocation4], 1
    %14 = vsyncpa %s13, 0
    loop: start=0, step=1, limit=4
    $region2: #{tpu_custom_call.1} parent=1 // loop_pre_header
      _
    $region3: #{tpu_custom_call.1} parent=1 // loop_header
      %s16 = sphi 0, %s20
      %p17 = scmp.ge.s32.totalorder %s16, 4
      %s23 = sphi 0, %s42
      %s24 = sphi 0, %s38
      %s25 = sphi 0, %s34
      %s26 = sphi 0, %s23
      %s27 = sphi 0, %s24
      %s28 = sphi 0, %s25
      %s29 = sphi 0, %s26
      %s30 = sphi 0, %s27
      %s31 = sphi 0, %s28
      %s47 = sphi 0, %s49
      %s50 = sphi 0, %s47
      %s51 = sphi 0, %s50
      %s67 = sphi 0, %s51
      %s75 = sphi 0, %s77
      %s78 = sphi 0, %s75
      %s79 = sphi 0, %s78
      %s95 = sphi 0, %s79
      %s101 = sphi 0, %s103
      %s104 = sphi 0, %s101
      %s105 = sphi 0, %s104
      %s121 = sphi 0, %s105
      %s129 = sphi 0, %s131
      %s132 = sphi 0, %s129
      %s133 = sphi 0, %s132
      %s149 = sphi 0, %s133
    $region4: #{tpu_custom_call.1} parent=1 // loop_header_branch
      %19 = sbr.rel (%p17) target = $region8
    $region5: #{tpu_custom_call.1} parent=1 // loop_body
      %s21 = ssub.s32 %s16, 1
      %s22 = ssub.s32 %s16, 2
      %s32 = sadd.s32 1, %s25
      %p33 = scmp.ge.s32.totalorder %s32, 1
      %s34 = scalar_select %p33, 0, %s32
      %s35 = sadd.s32 1, %s24
      %s36 = scalar_select %p33, %s35, %s24
      %p37 = scmp.ge.s32.totalorder %s36, 2
      %s38 = scalar_select %p37, 0, %s36
      %s39 = sadd.s32 1, %s23
      %s40 = scalar_select %p37, %s39, %s23
      %p41 = scmp.ge.s32.totalorder %s40, 1
      %s42 = scalar_select %p41, 0, %s40
      %s43 = ssub.s32 %s23, %s42
      %s44 = ssub.s32 %s25, %s34
      %s45 = sor.u32 %s43, %s44
      %p46 = scmp.eq.s32.totalorder %s45, 0
      %s48 = sadd.s32 %s47, 1
      %s49 = scalar_select %p46, %s47, %s48
      %p52 = pneg %p46
      %p53 = scmp.eq.s32.totalorder %s16, 1
      %p54 = por %p52, %p53
      %p55 = scmp.ne.s32.totalorder %s47, %s50
      %p56 = scmp.eq.s32.totalorder %s16, 0
      %p57 = por %p55, %p56
      %p58 = scmp.ne.s32.totalorder %s47, %s50
      %p59 = scmp.eq.s32.totalorder %s21, 1
      %p60 = por %p58, %p59
      %p61 = scmp.ne.s32.totalorder %s50, %s51
      %p62 = scmp.eq.s32.totalorder %s21, 0
      %p63 = por %p61, %p62
      %p64 = scmp.ne.s32.totalorder %s50, %s51
      %p65 = scmp.eq.s32.totalorder %s22, 1
      %p66 = por %p64, %p65
      %p68 = scmp.ne.s32.totalorder %s51, %s67
      %p69 = scmp.eq.s32.totalorder %s22, 0
      %p70 = por %p68, %p69
      %s71 = ssub.s32 %s25, %s34
      %s72 = ssub.s32 %s24, %s38
      %s73 = sor.u32 %s71, %s72
      %p74 = scmp.eq.s32.totalorder %s73, 0
      %s76 = sadd.s32 %s75, 1
      %s77 = scalar_select %p74, %s75, %s76
      %p80 = pneg %p74
      %p81 = scmp.eq.s32.totalorder %s16, 1
      %p82 = por %p80, %p81
      %p83 = scmp.ne.s32.totalorder %s75, %s78
      %p84 = scmp.eq.s32.totalorder %s16, 0
      %p85 = por %p83, %p84
      %p86 = scmp.ne.s32.totalorder %s75, %s78
      %p87 = scmp.eq.s32.totalorder %s21, 1
      %p88 = por %p86, %p87
      %p89 = scmp.ne.s32.totalorder %s78, %s79
      %p90 = scmp.eq.s32.totalorder %s21, 0
      %p91 = por %p89, %p90
      %p92 = scmp.ne.s32.totalorder %s78, %s79
      %p93 = scmp.eq.s32.totalorder %s22, 1
      %p94 = por %p92, %p93
      %p96 = scmp.ne.s32.totalorder %s79, %s95
      %p97 = scmp.eq.s32.totalorder %s22, 0
      %p98 = por %p96, %p97
      %s99 = ssub.s32 %s24, %s38
      %p100 = scmp.eq.s32.totalorder %s99, 0
      %s102 = sadd.s32 %s101, 1
      %s103 = scalar_select %p100, %s101, %s102
      %p106 = pneg %p100
      %p107 = scmp.eq.s32.totalorder %s16, 1
      %p108 = por %p106, %p107
      %p109 = scmp.ne.s32.totalorder %s101, %s104
      %p110 = scmp.eq.s32.totalorder %s16, 0
      %p111 = por %p109, %p110
      %p112 = scmp.ne.s32.totalorder %s101, %s104
      %p113 = scmp.eq.s32.totalorder %s21, 1
      %p114 = por %p112, %p113
      %p115 = scmp.ne.s32.totalorder %s104, %s105
      %p116 = scmp.eq.s32.totalorder %s21, 0
      %p117 = por %p115, %p116
      %p118 = scmp.ne.s32.totalorder %s104, %s105
      %p119 = scmp.eq.s32.totalorder %s22, 1
      %p120 = por %p118, %p119
      %p122 = scmp.ne.s32.totalorder %s105, %s121
      %p123 = scmp.eq.s32.totalorder %s22, 0
      %p124 = por %p122, %p123
      %s125 = ssub.s32 %s23, %s42
      %s126 = ssub.s32 %s24, %s38
      %s127 = sor.u32 %s125, %s126
      %p128 = scmp.eq.s32.totalorder %s127, 0
      %s130 = sadd.s32 %s129, 1
      %s131 = scalar_select %p128, %s129, %s130
      %p134 = pneg %p128
      %p135 = scmp.eq.s32.totalorder %s16, 1
      %p136 = por %p134, %p135
      %p137 = scmp.ne.s32.totalorder %s129, %s132
      %p138 = scmp.eq.s32.totalorder %s16, 0
      %p139 = por %p137, %p138
      %p140 = scmp.ne.s32.totalorder %s129, %s132
      %p141 = scmp.eq.s32.totalorder %s21, 1
      %p142 = por %p140, %p141
      %p143 = scmp.ne.s32.totalorder %s132, %s133
      %p144 = scmp.eq.s32.totalorder %s21, 0
      %p145 = por %p143, %p144
      %p146 = scmp.ne.s32.totalorder %s132, %s133
      %p147 = scmp.eq.s32.totalorder %s22, 1
      %p148 = por %p146, %p147
      %p150 = scmp.ne.s32.totalorder %s133, %s149
      %p151 = scmp.eq.s32.totalorder %s22, 0
      %p152 = por %p150, %p151
      %p153 = scmp.le.s32.totalorder 1, %s16
      %p154 = scmp.lt.s32.totalorder %s16, 3
      %p155 = pnand %p153, %p154
      %p156 = pneg %p155
      // Predicated region
      $region9: #{tpu_custom_call.1} parent=5 // pred_check
        _
      $region10: #{tpu_custom_call.1} parent=5 // pred_check_branch
        %158 = sbr.rel (%p155) target = $region12
      $region11: #{tpu_custom_call.1} parent=5 // pred_region
        %s159 = ssub.s32 %s16, 1
        // Predicated region
        $region13: #{tpu_custom_call.1} parent=11 // pred_check
          %p160 = pneg %p63
        $region14: #{tpu_custom_call.1} parent=11 // pred_check_branch
          %162 = sbr.rel (%p160) target = $region16
        $region15: #{tpu_custom_call.1} parent=11 // pred_region
          %s163 = smul.u32 2, %s26
          %s164 = smul.u32 2, %s28
          %s166 = ssub.s32 256, 256
          %167 = vsyncadd [#allocation3], %s166
          %s168 = smul.addr %s163, 2
          %s169 = sadd.s32 %s164, %s168
          %s170 = smul.addr %s169, 64
          %s171 = scalar_lea.hbm %s0, %s170
          %s172 = sshll.u32 [#allocation2], 4
          %s173 = int_to_ptr.vmem [resolvable:$true] %s172
          %178 = dma.hbm_to_vmem [thread:$0]  %s171, 256, %s173, [#allocation3], 128, 128, 8
        $region16: #{tpu_custom_call.1} parent=11 // pred_fallthru
          _
      $region12: #{tpu_custom_call.1} parent=5 // pred_fallthru
        _
      %p179 = scmp.lt.s32.totalorder %s16, 2
      // Predicated region
      $region17: #{tpu_custom_call.1} parent=5 // pred_check
        %p180 = pneg %p179
      $region18: #{tpu_custom_call.1} parent=5 // pred_check_branch
        %182 = sbr.rel (%p180) target = $region20
      $region19: #{tpu_custom_call.1} parent=5 // pred_region
        // Predicated region
        $region21: #{tpu_custom_call.1} parent=19 // pred_check
          %p183 = pneg %p85
        $region22: #{tpu_custom_call.1} parent=19 // pred_check_branch
          %185 = sbr.rel (%p183) target = $region24
        $region23: #{tpu_custom_call.1} parent=19 // pred_region
          %s186 = sand.u32 %s75, 1
          %s187 = scalar_lea.sflag [#allocation6], %s186
          %s188 = sand.u32 %s75, 1
          %s189 = smul.addr %s188, 128
          %s190 = scalar_lea.vmem [#allocation5], %s189
          %s191 = smul.u32 32, %s25
          %s193 = ssub.s32 2048, 2048
          %194 = vsyncadd %s187, %s193
          %s195 = smul.addr %s191, 2
          %s196 = sadd.s32 %s24, %s195
          %s197 = smul.addr %s196, 64
          %s198 = scalar_lea.hbm %s1, %s197
          %s199 = sshll.u32 %s190, 4
          %s200 = int_to_ptr.vmem [resolvable:$true] %s199
          %205 = dma.hbm_to_vmem [thread:$0]  %s198, 2048, %s200, %s187, 128, 64, 4
        $region24: #{tpu_custom_call.1} parent=19 // pred_fallthru
          _
        // Predicated region
        $region25: #{tpu_custom_call.1} parent=19 // pred_check
          %p206 = pneg %p111
        $region26: #{tpu_custom_call.1} parent=19 // pred_check_branch
          %208 = sbr.rel (%p206) target = $region28
        $region27: #{tpu_custom_call.1} parent=19 // pred_region
          %p209 = scmp.lt.s32.totalorder %s24, 1
          %s210 = scalar_select %p209, %s24, 1
          %s211 = scalar_lea.vmem %s2, %s210
        $region28: #{tpu_custom_call.1} parent=19 // pred_fallthru
          _
      $region20: #{tpu_custom_call.1} parent=5 // pred_fallthru
        _
      %p212 = scmp.le.s32.totalorder 1, %s16
      %p213 = scmp.lt.s32.totalorder %s16, 3
      %p214 = pnand %p212, %p213
      %p215 = pneg %p214
      // Predicated region
      $region29: #{tpu_custom_call.1} parent=5 // pred_check
        _
      $region30: #{tpu_custom_call.1} parent=5 // pred_check_branch
        %217 = sbr.rel (%p214) target = $region32
      $region31: #{tpu_custom_call.1} parent=5 // pred_region
        %s218 = ssub.s32 %s16, 1
        // Predicated region
        $region33: #{tpu_custom_call.1} parent=31 // pred_check
          %p219 = pneg %p63
        $region34: #{tpu_custom_call.1} parent=31 // pred_check_branch
          %221 = sbr.rel (%p219) target = $region36
        $region35: #{tpu_custom_call.1} parent=31 // pred_region
          %222 = dma.done [#allocation3], 256
        $region36: #{tpu_custom_call.1} parent=31 // pred_fallthru
          _
        %s223 = sand.u32 %s78, 1
        %s224 = scalar_lea.sflag [#allocation6], %s223
        %s225 = sand.u32 %s78, 1
        %s226 = smul.addr %s225, 128
        %s227 = scalar_lea.vmem [#allocation5], %s226
        // Predicated region
        $region37: #{tpu_custom_call.1} parent=31 // pred_check
          %p228 = pneg %p91
        $region38: #{tpu_custom_call.1} parent=31 // pred_check_branch
          %230 = sbr.rel (%p228) target = $region40
        $region39: #{tpu_custom_call.1} parent=31 // pred_region
          %231 = dma.done %s224, 2048
        $region40: #{tpu_custom_call.1} parent=31 // pred_fallthru
          _
        %p232 = pneg %p63
        %p233 = pneg %p60
        %s234 = sand.u32 %s78, 1
        %s235 = scalar_lea.sflag [#allocation6], %s234
        %s236 = sand.u32 %s78, 1
        %s237 = smul.addr %s236, 128
        %s238 = scalar_lea.vmem [#allocation5], %s237
        %p239 = pneg %p91
        %p240 = pneg %p88
        %p241 = scmp.lt.s32.totalorder %s27, 1
        %s242 = scalar_select %p241, %s27, 1
        %s243 = scalar_lea.vmem %s2, %s242
        %p244 = pneg %p117
        %p245 = pneg %p114
        %p246 = pneg %p145
        %p247 = pneg %p142
        %s248 = sand.u32 %s132, 1
        %s249 = scalar_lea.sflag [#allocation4], %s248
        %s250 = sand.u32 %s132, 1
        %s251 = smul.addr %s250, 16
        %s252 = scalar_lea.vmem [#allocation7], %s251
        %s253 = smul.u32 2, %s26
        %s254 = smul.u32 2, %s28
        %s255 = smul.u32 32, %s28
        %p256 = scmp.lt.s32.totalorder %s27, 1
        %s257 = scalar_select %p256, %s27, 1
        %s258 = scalar_lea.vmem %s2, %s257
        %s259 = smul.u32 2, %s26
        %p261 = scmp.eq.s32.totalorder %s28, 0
        // Predicated region
        $region41: #{tpu_custom_call.1} parent=31 // pred_check
          %p262 = pneg %p261
        $region42: #{tpu_custom_call.1} parent=31 // pred_check_branch
          %264 = sbr.rel (%p262) target = $region44
        $region43: #{tpu_custom_call.1} parent=31 // pred_region
          %265 = vst [vmem:[%s252] sm:$0xff] 0.0
          %266 = vst [vmem:[%s252 + $0x8] sm:$0xff] 0.0
        $region44: #{tpu_custom_call.1} parent=31 // pred_fallthru
          _
        %v267 = vld [vmem:[%s252] sm:$0xff]
        %v268 = vld [vmem:[%s252 + $0x8] sm:$0xff]
        %v269 = vld [vmem:[#allocation2] sm:$0xff]
        %v270 = vld [vmem:[#allocation2 + $0x8] sm:$0xff]
        %v271 = vld [vmem:[%s227] sm:$0xf]
        %v272 = vld [vmem:[%s227 + $0x4] sm:$0xf]
        %v273 = vld [vmem:[%s227 + $0x8] sm:$0xf]
        %v274 = vld [vmem:[%s227 + $0xc] sm:$0xf]
        %v275 = vld [vmem:[%s227 + $0x10] sm:$0xf]
        %v276 = vld [vmem:[%s227 + $0x14] sm:$0xf]
        %v277 = vld [vmem:[%s227 + $0x18] sm:$0xf]
        %v278 = vld [vmem:[%s227 + $0x1c] sm:$0xf]
        %v279 = vld [vmem:[%s227 + $0x20] sm:$0xf]
        %v280 = vld [vmem:[%s227 + $0x24] sm:$0xf]
        %v281 = vld [vmem:[%s227 + $0x28] sm:$0xf]
        %v282 = vld [vmem:[%s227 + $0x2c] sm:$0xf]
        %v283 = vld [vmem:[%s227 + $0x30] sm:$0xf]
        %v284 = vld [vmem:[%s227 + $0x34] sm:$0xf]
        %v285 = vld [vmem:[%s227 + $0x38] sm:$0xf]
        %v286 = vld [vmem:[%s227 + $0x3c] sm:$0xf]
        %v287 = vld [vmem:[%s227 + $0x40] sm:$0xf]
        %v288 = vld [vmem:[%s227 + $0x44] sm:$0xf]
        %v289 = vld [vmem:[%s227 + $0x48] sm:$0xf]
        %v290 = vld [vmem:[%s227 + $0x4c] sm:$0xf]
        %v291 = vld [vmem:[%s227 + $0x50] sm:$0xf]
        %v292 = vld [vmem:[%s227 + $0x54] sm:$0xf]
        %v293 = vld [vmem:[%s227 + $0x58] sm:$0xf]
        %v294 = vld [vmem:[%s227 + $0x5c] sm:$0xf]
        %v295 = vld [vmem:[%s227 + $0x60] sm:$0xf]
        %v296 = vld [vmem:[%s227 + $0x64] sm:$0xf]
        %v297 = vld [vmem:[%s227 + $0x68] sm:$0xf]
        %v298 = vld [vmem:[%s227 + $0x6c] sm:$0xf]
        %v299 = vld [vmem:[%s227 + $0x70] sm:$0xf]
        %v300 = vld [vmem:[%s227 + $0x74] sm:$0xf]
        %v301 = vld [vmem:[%s227 + $0x78] sm:$0xf]
        %v302 = vld [vmem:[%s227 + $0x7c] sm:$0xf]
        %v305 = vunpack.c.l.b16 %v269
        %v306 = vunpack.c.h.b16 %v269
        %v307 = vunpack.c.l.b16 %v270
        %v308 = vunpack.c.h.b16 %v270
        %v309 = vpack.c.b16 %v307, %v305
        %v310 = vpack.c.b16 %v308, %v306
        %v345 = vunpack.c.l.b16 %v271
        %v346 = vunpack.c.l.b16 %v272
        %v347 = vunpack.c.l.b16 %v273
        %v348 = vunpack.c.l.b16 %v274
        %v349 = vunpack.c.l.b16 %v275
        %v350 = vunpack.c.l.b16 %v276
        %v351 = vunpack.c.l.b16 %v277
        %v352 = vunpack.c.l.b16 %v278
        %v353 = vunpack.c.l.b16 %v279
        %v354 = vunpack.c.l.b16 %v280
        %v355 = vunpack.c.l.b16 %v281
        %v356 = vunpack.c.l.b16 %v282
        %v357 = vunpack.c.l.b16 %v283
        %v358 = vunpack.c.l.b16 %v284
        %v359 = vunpack.c.l.b16 %v285
        %v360 = vunpack.c.l.b16 %v286
        %v361 = vunpack.c.l.b16 %v287
        %v362 = vunpack.c.l.b16 %v288
        %v363 = vunpack.c.l.b16 %v289
        %v364 = vunpack.c.l.b16 %v290
        %v365 = vunpack.c.l.b16 %v291
        %v366 = vunpack.c.l.b16 %v292
        %v367 = vunpack.c.l.b16 %v293
        %v368 = vunpack.c.l.b16 %v294
        %v369 = vunpack.c.l.b16 %v295
        %v370 = vunpack.c.l.b16 %v296
        %v371 = vunpack.c.l.b16 %v297
        %v372 = vunpack.c.l.b16 %v298
        %v373 = vunpack.c.l.b16 %v299
        %v374 = vunpack.c.l.b16 %v300
        %v375 = vunpack.c.l.b16 %v301
        %v376 = vunpack.c.l.b16 %v302
        %v377 = vpack.c.b16 %v346, %v345
        %v378 = vpack.c.b16 %v348, %v347
        %v379 = vpack.c.b16 %v350, %v349
        %v380 = vpack.c.b16 %v352, %v351
        %v381 = vpack.c.b16 %v354, %v353
        %v382 = vpack.c.b16 %v356, %v355
        %v383 = vpack.c.b16 %v358, %v357
        %v384 = vpack.c.b16 %v360, %v359
        %v385 = vpack.c.b16 %v362, %v361
        %v386 = vpack.c.b16 %v364, %v363
        %v387 = vpack.c.b16 %v366, %v365
        %v388 = vpack.c.b16 %v368, %v367
        %v389 = vpack.c.b16 %v370, %v369
        %v390 = vpack.c.b16 %v372, %v371
        %v391 = vpack.c.b16 %v374, %v373
        %v392 = vpack.c.b16 %v376, %v375
        %409 = vmatprep.subr.bf16.mxu0 0
        %410 = vmatpush1.bf16.msra.mxu0 %v384
        %411 = vmatprep.subr.bf16.mxu0 0
        %412 = vmatpush1.bf16.msra.mxu0 %v383
        %413 = vmatprep.subr.bf16.mxu0 0
        %414 = vmatpush1.bf16.msra.mxu0 %v382
        %415 = vmatprep.subr.bf16.mxu0 0
        %416 = vmatpush1.bf16.msra.mxu0 %v381
        %417 = vmatprep.subr.bf16.mxu0 0
        %418 = vmatpush1.bf16.msra.mxu0 %v380
        %419 = vmatprep.subr.bf16.mxu0 0
        %420 = vmatpush1.bf16.msra.mxu0 %v379
        %421 = vmatprep.subr.bf16.mxu0 0
        %422 = vmatpush1.bf16.msra.mxu0 %v378
        %423 = vmatprep.subr.bf16.mxu0 0
        %424 = vmatpush1.bf16.msra.mxu0 %v377
        %425 = vmatprep.subr.bf16.mxu0 0
        %426 = vmatpush2.bf16.msra.mxu0 %v392
        %427 = vmatprep.subr.bf16.mxu0 0
        %428 = vmatpush2.bf16.msra.mxu0 %v391
        %429 = vmatprep.subr.bf16.mxu0 0
        %430 = vmatpush2.bf16.msra.mxu0 %v390
        %431 = vmatprep.subr.bf16.mxu0 0
        %432 = vmatpush2.bf16.msra.mxu0 %v389
        %433 = vmatprep.subr.bf16.mxu0 0
        %434 = vmatpush2.bf16.msra.mxu0 %v388
        %435 = vmatprep.subr.bf16.mxu0 0
        %436 = vmatpush2.bf16.msra.mxu0 %v387
        %437 = vmatprep.subr.bf16.mxu0 0
        %438 = vmatpush2.bf16.msra.mxu0 %v386
        %439 = vmatprep.subr.bf16.mxu0 0
        %440 = vmatpush2.bf16.msra.mxu0 %v385
        %441 = vmatprep.mubr.bf16.mxu0 %v310
        %442 = vmatmul.mubr.bf16.gmra.mxu0 %v309
        %v443 = vpop.f32.mrf.mxu0
        %v444 = vadd.f32 0.0, %v443
        %v445 = vpop.f32.mrf.mxu0
        %v446 = vpop.f32.mrf.mxu0
        %v447 = vadd.f32 0.0, %v446
        %v448 = vpop.f32.mrf.mxu0
        %449 = vdwg.mxu0
        %v450 = vadd.f32 %v267, %v444
        %v451 = vadd.f32 %v268, %v447
        %452 = vst [vmem:[%s252] sm:$0xff] %v450
        %453 = vst [vmem:[%s252 + $0x8] sm:$0xff] %v451
        // Predicated region
        $region45: #{tpu_custom_call.1} parent=31 // pred_check
          %p454 = pneg %p261
        $region46: #{tpu_custom_call.1} parent=31 // pred_check_branch
          %456 = sbr.rel (%p454) target = $region48
        $region47: #{tpu_custom_call.1} parent=31 // pred_region
          %v457 = vld [vmem:[%s252] sm:$0xff]
          %v458 = vld [vmem:[%s252 + $0x8] sm:$0xff]
          %v459 = vld [vmem:[%s258] sm:$0x1]
          %v461 = vlaneseq
          %v462 = vshrl.u32 %v461, 7
          %v463 = vsub.s32 0, %v462
          %v464 = vrot.slane %v459, %v463
          %v466 = vadd.f32 %v457, %v464
          %v467 = vadd.f32 %v458, %v464
          %468 = vst [vmem:[%s252] sm:$0xff] %v466
          %469 = vst [vmem:[%s252 + $0x8] sm:$0xff] %v467
        $region48: #{tpu_custom_call.1} parent=31 // pred_fallthru
          _
        %s470 = sand.u32 %s132, 1
        %s471 = scalar_lea.sflag [#allocation4], %s470
        %s472 = sand.u32 %s132, 1
        %s473 = smul.addr %s472, 16
        %s474 = scalar_lea.vmem [#allocation7], %s473
        // Predicated region
        $region49: #{tpu_custom_call.1} parent=31 // pred_check
          %p475 = pneg %p142
        $region50: #{tpu_custom_call.1} parent=31 // pred_check_branch
          %477 = sbr.rel (%p475) target = $region52
        $region51: #{tpu_custom_call.1} parent=31 // pred_region
          %s478 = smul.u32 2, %s26
          %s480 = ssub.s32 256, 256
          %481 = vsyncadd %s471, %s480
          %s482 = smul.addr %s478, 2
          %s483 = sadd.s32 %s27, %s482
          %s484 = smul.addr %s483, 128
          %s485 = scalar_lea.hbm %s3, %s484
          %s486 = sshll.u32 %s474, 4
          %s487 = int_to_ptr.vmem [resolvable:$true] %s486
          %492 = dma.vmem_to_hbm [thread:$0]  %s487, 256, %s485, %s471, 128, 256, 8
        $region52: #{tpu_custom_call.1} parent=31 // pred_fallthru
          _
      $region32: #{tpu_custom_call.1} parent=5 // pred_fallthru
        _
      %p493 = scmp.le.s32.totalorder 2, %s16
      // Predicated region
      $region53: #{tpu_custom_call.1} parent=5 // pred_check
        %p494 = pneg %p493
      $region54: #{tpu_custom_call.1} parent=5 // pred_check_branch
        %496 = sbr.rel (%p494) target = $region56
      $region55: #{tpu_custom_call.1} parent=5 // pred_region
        %s497 = ssub.s32 %s16, 2
        // Predicated region
        $region57: #{tpu_custom_call.1} parent=55 // pred_check
          %p498 = pneg %p148
        $region58: #{tpu_custom_call.1} parent=55 // pred_check_branch
          %500 = sbr.rel (%p498) target = $region60
        $region59: #{tpu_custom_call.1} parent=55 // pred_region
          %s501 = sand.u32 %s133, 1
          %s502 = scalar_lea.sflag [#allocation4], %s501
          %s503 = sand.u32 %s133, 1
          %s504 = smul.addr %s503, 16
          %s505 = scalar_lea.vmem [#allocation7], %s504
          %506 = dma.done %s502, 256
        $region60: #{tpu_custom_call.1} parent=55 // pred_fallthru
          _
      $region56: #{tpu_custom_call.1} parent=5 // pred_fallthru
        _
    $region6: #{tpu_custom_call.1} parent=1 // loop_footer
      %s20 = sadd.s32 1, %s16
    $region7: #{tpu_custom_call.1} parent=1 // loop_footer_branch
      %15 = sbr.rel target = $region3
    $region8: #{tpu_custom_call.1} parent=1 // loop_exit
      _
    %507 = vsyncpa [#allocation3], 1
    %s508 = scalar_lea.sflag [#allocation3], 1
    %509 = vsyncpa %s508, 1
    %510 = vsyncpa [#allocation6], 1
    %s511 = scalar_lea.sflag [#allocation6], 1
    %512 = vsyncpa %s511, 1
    %513 = vsyncpa [#allocation4], 1
    %s514 = scalar_lea.sflag [#allocation4], 1
    %515 = vsyncpa %s514, 1

</llo_original>
